<compile_context>
chip_gen: v5e
topology: v5e:2x2
jax: 0.10.0
libtpu: 0.0.40
codegen_flags: <defaults>
</compile_context>

<pallas_src>
import jax
import jax.numpy as jnp
from jax.experimental import pallas as pl
from jax.experimental.pallas import tpu as pltpu

ALPHA = 0.25
GAMMA = 2              # hard-coded as (1 - pt) * (1 - pt) below

LANES = 128
MAX_BLOCK_ROWS = 2048  # 2048 * 128 * 4B = 1 MiB per f32 input block (sweepable)


def _round_up(x, m):
    return ((x + m - 1) // m) * m


def _sublane_multiple(dtype):
    # second-to-last block dim must be a multiple of 8/16/32 for 4/2/1-byte dtypes
    itemsize = jnp.dtype(dtype).itemsize
    return max(8, 32 // max(itemsize, 1))


def _choose_block_rows(rows, sub, max_rows):
    """Legal row-block size: a multiple of `sub` never exceeding the array,
    or the full extent for tiny arrays; split to >=2 tiles when possible so the
    "parallel" grid axis can use both v7x TensorCores."""
    if rows <= sub:
        return rows                                   # full-extent block (always legal)
    max_rows = max(sub, (max_rows // sub) * sub)
    br = min(max_rows, (rows // sub) * sub)
    if pl.cdiv(rows, br) == 1:
        br = min(br, _round_up(pl.cdiv(rows, 2), sub))
    return br


def _make_kernel(rem, need_mask, approx_reciprocal):
    """rem = number of valid elements in the LAST tile (static, <= block elems)."""

    def kernel(x_ref, t_ref, partial_ref):
        x = x_ref[...].astype(jnp.float32)
        t = t_ref[...].astype(jnp.float32)

        # Numerically-stable BCE-with-logits (same formula PyTorch uses):
        #   max(x, 0) - x*t + log(1 + exp(-|x|))
        e = jnp.exp(-jnp.abs(x))
        bce = jnp.maximum(x, 0.0) - x * t + jnp.log1p(e)

        # alpha gather on binary targets == one FMA: 0.25 + 0.5 * t
        at = ALPHA + (1.0 - 2.0 * ALPHA) * t

        # (1 - pt) with pt = exp(-bce), reconstructed exactly for binary targets:
        #   exp(-bce) = [1 if sign(x) agrees with label else e] / (1 + e)
        #   1 - pt    = [e if agree else 1] / (1 + e)
        agree = (t > 0.5) == (x > 0.0)
        inv = pl.reciprocal(1.0 + e, approx=approx_reciprocal)
        one_minus_pt = jnp.where(agree, e, 1.0) * inv

        floss = at * (one_minus_pt * one_minus_pt) * bce  # gamma == 2

        if need_mask:  # static: only emitted when the last tile is ragged/padded
            last = pl.program_id(0) == pl.num_programs(0) - 1

            @pl.when(last)
            def _():
                row = jax.lax.broadcasted_iota(jnp.int32, floss.shape, 0)
                lane = jax.lax.broadcasted_iota(jnp.int32, floss.shape, 1)
                local = row * LANES + lane
                # select (not multiply): the ragged region holds undefined VMEM
                # data that may be NaN/Inf.
                partial_ref[0, 0] = jnp.sum(jnp.where(local < rem, floss, 0.0))

            @pl.when(jnp.logical_not(last))
            def _():
                partial_ref[0, 0] = jnp.sum(floss)
        else:
            partial_ref[0, 0] = jnp.sum(floss)

    return kernel


def weighted_focal_loss(inputs, targets, *, max_block_rows=MAX_BLOCK_ROWS,
                        approx_reciprocal=False):
    """Focal loss with alpha=0.25, gamma=2 (mean reduction).

    inputs:  logits, any shape, float dtype.
    targets: same shape, values EXACTLY in {0, 1}.  Keep them in a narrow dtype
             (int8/bool/bf16) at the producer -- the kernel casts in VMEM, so
             narrow targets directly reduce HBM traffic.
    approx_reciprocal: set True on a compute-bound v7x to use the EUP approx
             reciprocal (~1e-3 rel. error in (1-pt)).
    Returns a scalar f32, matching the PyTorch module.
    """
    assert inputs.shape == targets.shape
    x = inputs.reshape(-1)     # bitcast for default row-major layouts: no copy
    t = targets.reshape(-1)
    n = x.shape[0]

    sub = max(_sublane_multiple(x.dtype), _sublane_multiple(t.dtype))
    rows = pl.cdiv(n, LANES)
    pad = rows * LANES - n     # < 128

    # Pad only the <128-element tail up to the next lane boundary; for
    # 128-aligned n this branch is skipped entirely (pure bitcast reshape).
    if pad:
        x = jnp.pad(x, (0, pad))
        t = jnp.pad(t, (0, pad))
    x2d = x.reshape(rows, LANES)
    t2d = t.reshape(rows, LANES)

    block_rows = _choose_block_rows(rows, sub, max_block_rows)
    num_tiles = pl.cdiv(rows, block_rows)
    block_elems = block_rows * LANES
    rem = n - (num_tiles - 1) * block_elems      # valid elements in the last tile
    need_mask = rem != block_elems

    kernel = _make_kernel(rem, need_mask, approx_reciprocal)

    cost = pl.CostEstimate(
        flops=16 * n,
        transcendentals=2 * n,
        bytes_accessed=(x2d.size * x2d.dtype.itemsize
                        + t2d.size * t2d.dtype.itemsize
                        + num_tiles * 4),
    )

    partials = pl.pallas_call(
        kernel,
        out_shape=jax.ShapeDtypeStruct((num_tiles, 1), jnp.float32),
        grid_spec=pltpu.PrefetchScalarGridSpec(
            num_scalar_prefetch=0,
            grid=(num_tiles,),
            in_specs=[
                pl.BlockSpec((block_rows, LANES), lambda i: (i, 0)),
                pl.BlockSpec((block_rows, LANES), lambda i: (i, 0)),
            ],
            # Each tile writes its own (1,1) SMEM partial -> fully independent
            # grid steps, reduced with one jnp.sum in the wrapper.
            out_specs=pl.BlockSpec((1, 1), lambda i: (i, 0),
                                   memory_space=pltpu.SMEM),
        ),
        compiler_params=pltpu.CompilerParams(
            dimension_semantics=("parallel",),
        ),
        cost_estimate=cost,
    )(x2d, t2d)

    return jnp.sum(partials) / jnp.float32(n)


def _reference(inputs, targets):
    x = inputs.reshape(-1).astype(jnp.float32)
    t = targets.reshape(-1).astype(jnp.float32)
    bce = jnp.maximum(x, 0.0) - x * t + jnp.log1p(jnp.exp(-jnp.abs(x)))
    at = jnp.where(t > 0.5, 1.0 - ALPHA, ALPHA)
    pt = jnp.exp(-bce)
    return jnp.mean(at * (1.0 - pt) ** GAMMA * bce)


if __name__ == "__main__":
    key = jax.random.PRNGKey(0)
    k1, k2, k3, k4 = jax.random.split(key, 4)

    # (a) Detection-head-like 128-aligned shape, int8 targets (producer-side
    #     narrow dtype): zero-copy path, no padding, no mask code emitted.
    shape = (2, 4, 16, 16)                      # 2048 elements
    logits_a = jax.random.normal(k1, shape, dtype=jnp.float32) * 2.0
    targets_a = jax.random.bernoulli(k2, 0.3, shape).astype(jnp.int8)
    out_a = jax.block_until_ready(weighted_focal_loss(logits_a, targets_a))
    ref_a = jax.block_until_ready(_reference(logits_a, targets_a))
    assert jnp.allclose(out_a, ref_a, rtol=1e-5, atol=1e-6), (out_a, ref_a)

    # (b) Non-128-aligned flat size: exercises the small tail pad, the
    #     last-tile-only mask, and the automatic >=2-tile split.
    N = 2000
    logits_b = jax.random.normal(k3, (N,), dtype=jnp.float32) * 2.0
    targets_b = jax.random.bernoulli(k4, 0.3, (N,)).astype(jnp.float32)
    out_b = jax.block_until_ready(weighted_focal_loss(logits_b, targets_b))
    ref_b = jax.block_until_ready(_reference(logits_b, targets_b))
    assert jnp.allclose(out_b, ref_b, rtol=1e-5, atol=1e-6), (out_b, ref_b)

    # (c) Force small blocks -> multi-tile grid with a ragged, masked last tile
    #     (exercises both pl.when branches across interior/last tiles).
    out_c = jax.block_until_ready(
        weighted_focal_loss(logits_b, targets_b, max_block_rows=8))
    assert jnp.allclose(out_c, ref_b, rtol=1e-5, atol=1e-6), (out_c, ref_b)

    print("KERNEL_OK")
</pallas_src>

<mosaic_0001>
module attributes {stable_mosaic.version = 11 : i64} {
  func.func @kernel(%arg0: i32, %arg1: memref<16x128xf32, #tpu.memory_space<vmem>>, %arg2: memref<16x128xi8, #tpu.memory_space<vmem>>, %arg3: memref<1x1xf32, #tpu.memory_space<smem>>) attributes {dimension_semantics = [#tpu.dimension_semantics<parallel>], iteration_bounds = array<i64: 1>, scalar_prefetch = 0 : i64, scratch_operands = 0 : i64, tpu.core_type = #tpu.core_type<tc>, window_params = [{transform_indices = @transform_0, window_bounds = array<i64: 16, 128>}, {transform_indices = @transform_1, window_bounds = array<i64: 16, 128>}, {transform_indices = @transform_2, window_bounds = array<i64: 1, 1>}]} {
    %c0 = arith.constant 0 : index
    %c0_0 = arith.constant 0 : index
    %0 = vector.load %arg1[%c0, %c0_0] : memref<16x128xf32, #tpu.memory_space<vmem>>, vector<16x128xf32>
    %c0_1 = arith.constant 0 : index
    %c0_2 = arith.constant 0 : index
    %1 = vector.load %arg2[%c0_1, %c0_2] : memref<16x128xi8, #tpu.memory_space<vmem>>, vector<16x128xi8>
    %2 = arith.sitofp %1 : vector<16x128xi8> to vector<16x128xf32>
    %3 = math.absf %0 : vector<16x128xf32>
    %cst = arith.constant 0.000000e+00 : f32
    %4 = vector.broadcast %cst : f32 to vector<16x128xf32>
    %5 = arith.subf %4, %3 : vector<16x128xf32>
    %6 = math.exp %5 : vector<16x128xf32>
    %cst_3 = arith.constant 0.000000e+00 : f32
    %7 = vector.broadcast %cst_3 : f32 to vector<16x128xf32>
    %8 = arith.maximumf %0, %7 : vector<16x128xf32>
    %9 = arith.mulf %0, %2 : vector<16x128xf32>
    %10 = arith.subf %8, %9 : vector<16x128xf32>
    %11 = math.log1p %6 : vector<16x128xf32>
    %12 = arith.addf %10, %11 : vector<16x128xf32>
    %cst_4 = arith.constant 5.000000e-01 : f32
    %13 = vector.broadcast %cst_4 : f32 to vector<16x128xf32>
    %14 = arith.mulf %13, %2 : vector<16x128xf32>
    %cst_5 = arith.constant 2.500000e-01 : f32
    %15 = vector.broadcast %cst_5 : f32 to vector<16x128xf32>
    %16 = arith.addf %15, %14 : vector<16x128xf32>
    %cst_6 = arith.constant 5.000000e-01 : f32
    %17 = vector.broadcast %cst_6 : f32 to vector<16x128xf32>
    %18 = arith.cmpf ogt, %2, %17 : vector<16x128xf32>
    %cst_7 = arith.constant 0.000000e+00 : f32
    %19 = vector.broadcast %cst_7 : f32 to vector<16x128xf32>
    %20 = arith.cmpf ogt, %0, %19 : vector<16x128xf32>
    %21 = arith.xori %18, %20 : vector<16x128xi1>
    %cst_8 = arith.constant dense<true> : vector<16x128xi1>
    %22 = arith.xori %21, %cst_8 : vector<16x128xi1>
    %cst_9 = arith.constant 1.000000e+00 : f32
    %23 = vector.broadcast %cst_9 : f32 to vector<16x128xf32>
    %24 = arith.addf %23, %6 : vector<16x128xf32>
    %25 = tpu.reciprocal %24 : vector<16x128xf32> -> vector<16x128xf32>
    %cst_10 = arith.constant 1.000000e+00 : f32
    %26 = vector.broadcast %cst_10 : f32 to vector<16x128xf32>
    %27 = arith.select %22, %6, %26 : vector<16x128xi1>, vector<16x128xf32>
    %28 = arith.mulf %27, %25 : vector<16x128xf32>
    %29 = arith.mulf %28, %28 : vector<16x128xf32>
    %30 = arith.mulf %16, %29 : vector<16x128xf32>
    %31 = arith.mulf %30, %12 : vector<16x128xf32>
    %32 = vector.shape_cast %31 : vector<16x128xf32> to vector<1x16x128xf32>
    %cst_11 = arith.constant dense<0.000000e+00> : vector<1xf32>
    %33 = vector.multi_reduction <add>, %32, %cst_11 [1, 2] : vector<1x16x128xf32> to vector<1xf32>
    %34 = vector.shape_cast %33 : vector<1xf32> to vector<1x1x1xf32>
    %35 = vector.extract %34[0, 0, 0] : f32 from vector<1x1x1xf32>
    %c0_12 = arith.constant 0 : index
    %c0_13 = arith.constant 0 : index
    %36 = memref.load %arg3[%c0_12, %c0_13] : memref<1x1xf32, #tpu.memory_space<smem>>
    memref.store %35, %arg3[%c0_12, %c0_13] : memref<1x1xf32, #tpu.memory_space<smem>>
    return
  }
  func.func @transform_0(%arg0: i32) -> (i32, i32) {
    %c0_i32 = arith.constant 0 : i32
    %c0_i32_0 = arith.constant 0 : i32
    return %arg0, %c0_i32 : i32, i32
  }
  func.func @transform_1(%arg0: i32) -> (i32, i32) {
    %c0_i32 = arith.constant 0 : i32
    %c0_i32_0 = arith.constant 0 : i32
    return %arg0, %c0_i32 : i32, i32
  }
  func.func @transform_2(%arg0: i32) -> (i32, i32) {
    %c0_i32 = arith.constant 0 : i32
    %c0_i32_0 = arith.constant 0 : i32
    return %arg0, %c0_i32 : i32, i32
  }
}

</mosaic_0001>

<llo_original>
// kernel: tpu_custom_call.1
$region0: #{tpu_custom_call.1}
  #allocation0 [shape = 'u32[]', space=smem, size = 0x4, offset = 0x4, fixed_abs, tag = 'smem constant byte address 0x4 - core index']
  #allocation1 [shape = 'u32[72,128]{1,0:T(1,128)}', space=vmem, size = 0x9000, scoped, tag = 'internal scratch']
  %s0 = inlined_call_operand.hbm [shape: f32[16,128], index: 0, kind: input, shape index: {}]
  %s1 = inlined_call_operand.hbm [shape: s8[16,128], index: 1, kind: input, shape index: {}]
  %s2 = inlined_call_operand.hbm [shape: f32[1,1], index: 2, kind: output, shape index: {}]
  %s3 = sld [smem:[#allocation0]]
  $region26: #{tpu_custom_call.1} parent=0
    _
  %s5 = ssub.s32 1, %s3
  %s6 = scalar_select 0, %s5, %s3
  $region1: #{tpu_custom_call.1} parent=0
    #allocation2 [shape = 'u8[8192]{0}', space=vmem, size = 0x2000, scoped, tag = 'input window, operand 0, single buffered']
    #allocation3 [shape = 's32[1]{0}', space=sflag, size = 0x4, scoped, tag = 'scoped memory for tpu_custom_call.1']
    #allocation4 [shape = 's32[1]{0}', space=sflag, size = 0x4, scoped, tag = 'scoped memory for tpu_custom_call.1']
    #allocation5 [shape = 'u8[2048]{0}', space=vmem, size = 0x800, scoped, tag = 'input window, operand 1, single buffered']
    #allocation6 [shape = 's32[1]{0}', space=sflag, size = 0x4, scoped, tag = 'scoped memory for tpu_custom_call.1']
    #allocation7 [shape = 'u8[512]{0}', space=smem, size = 0x200, scoped, tag = 'output window, operand 0, single buffered']
    %7 = vsyncpa [#allocation3], 0
    %8 = vsyncpa [#allocation6], 0
    %9 = vsyncpa [#allocation4], 0
    // Predicated region
    $region2: #{tpu_custom_call.1} parent=1 // pred_check
      _
    $region3: #{tpu_custom_call.1} parent=1 // pred_check_branch
      %11 = sbr.rel (0) target = $region5
    $region4: #{tpu_custom_call.1} parent=1 // pred_region
      %13 = vsyncadd [#allocation3], 0
      %s14 = sshll.u32 %s0, 4
      %s15 = int_to_ptr.hbm [resolvable:$true] %s14
      %s16 = sshll.u32 [#allocation2], 4
      %s17 = int_to_ptr.vmem [resolvable:$true] %s16
      %22 = dma.hbm_to_vmem [thread:$0]  %s15, 256, %s17, [#allocation3], 128, 128, 8
    $region5: #{tpu_custom_call.1} parent=1 // pred_fallthru
      _
    // Predicated region
    $region6: #{tpu_custom_call.1} parent=1 // pred_check
      _
    $region7: #{tpu_custom_call.1} parent=1 // pred_check_branch
      %24 = sbr.rel (0) target = $region9
    $region8: #{tpu_custom_call.1} parent=1 // pred_region
      %26 = vsyncadd [#allocation6], 0
      %s27 = sshll.u32 %s1, 4
      %s28 = int_to_ptr.hbm [resolvable:$true] %s27
      %s29 = sshll.u32 [#allocation5], 4
      %s30 = int_to_ptr.vmem [resolvable:$true] %s29
      %35 = dma.hbm_to_vmem [thread:$0]  %s28, 64, %s30, [#allocation6], 32, 32, 2
    $region9: #{tpu_custom_call.1} parent=1 // pred_fallthru
      _
    // Predicated region
    $region10: #{tpu_custom_call.1} parent=1 // pred_check
      _
    $region11: #{tpu_custom_call.1} parent=1 // pred_check_branch
      %37 = sbr.rel (0) target = $region13
    $region12: #{tpu_custom_call.1} parent=1 // pred_region
      %39 = dma.done [#allocation3], 256
    $region13: #{tpu_custom_call.1} parent=1 // pred_fallthru
      _
    // Predicated region
    $region14: #{tpu_custom_call.1} parent=1 // pred_check
      _
    $region15: #{tpu_custom_call.1} parent=1 // pred_check_branch
      %41 = sbr.rel (0) target = $region17
    $region16: #{tpu_custom_call.1} parent=1 // pred_region
      %43 = dma.done [#allocation6], 64
    $region17: #{tpu_custom_call.1} parent=1 // pred_fallthru
      _
    %v44 = vld [vmem:[#allocation2] sm:$0xff]
    %v45 = vld [vmem:[#allocation2 + $0x8] sm:$0xff]
    %v46 = vld [vmem:[#allocation5] sm:$0x3]
    %v47 = vld [vmem:[#allocation5 + $0x2] sm:$0x3]
    %v48 = vunpack.c.0.s8 %v46
    %v49 = vunpack.c.0.s8 %v47
    %v50 = vcvt.s32.f32 %v48
    %v51 = vcvt.s32.f32 %v49
    %v52 = vand.u32 2147483647, %v44
    %v53 = vand.u32 2147483647, %v45
    %v54 = vsub.f32 0.0, %v52
    %v55 = vsub.f32 0.0, %v53
    %v56 = vmul.f32 %v54, 1.442695
    %v57 = vpow.pop %v56
    %v58 = vmul.f32 %v55, 1.442695
    %v59 = vpow.pop %v58
    %v60 = vmax.f32 %v44, 0.0
    %v61 = vmax.f32 %v45, 0.0
    %v62 = vmul.f32 %v44, %v50
    %v63 = vmul.f32 %v45, %v51
    %v64 = vsub.f32 %v60, %v62
    %v65 = vsub.f32 %v61, %v63
    %v66 = vadd.f32 %v57, 1.0
    %v67 = vlog2.pop %v66
    %v68 = vmul.f32 %v67, 0.6931472
    %v69 = vmul.f32 -0.5, %v57
    %v70 = vadd.f32 %v69, 1.0
    %v71 = vmul.f32 %v70, %v57
    %v72 = vand.u32 2147483647, %v57
    %vm73 = vcmp.lt.f32.partialorder %v72, 0.0004427343
    %v74 = vsel %vm73, %v71, %v68
    %v75 = vadd.f32 %v59, 1.0
    %v76 = vlog2.pop %v75
    %v77 = vmul.f32 %v76, 0.6931472
    %v78 = vmul.f32 -0.5, %v59
    %v79 = vadd.f32 %v78, 1.0
    %v80 = vmul.f32 %v79, %v59
    %v81 = vand.u32 2147483647, %v59
    %vm82 = vcmp.lt.f32.partialorder %v81, 0.0004427343
    %v83 = vsel %vm82, %v80, %v77
    %v84 = vadd.f32 %v64, %v74
    %v85 = vadd.f32 %v65, %v83
    %v86 = vmul.f32 %v50, 0.5
    %v87 = vmul.f32 %v51, 0.5
    %v88 = vadd.f32 %v86, 0.25
    %v89 = vadd.f32 %v87, 0.25
    %vm90 = vcmp.gt.f32.partialorder %v50, 0.5
    %vm91 = vcmp.gt.f32.partialorder %v51, 0.5
    %vm92 = vcmp.gt.f32.partialorder %v44, 0.0
    %vm93 = vcmp.gt.f32.partialorder %v45, 0.0
    %vm94 = vmxor %vm90, %vm92
    %vm95 = vmxor %vm91, %vm93
    %vm96 = vmxor %vm94, 1
    %vm97 = vmxor %vm95, 1
    %v98 = vadd.f32 %v57, 1.0
    %v99 = vadd.f32 %v59, 1.0
    %v100 = vrcp.pop %v98
    %v101 = vmul.f32 %v98, %v100
    %v102 = vsub.f32 1.0, %v101
    %v103 = vmul.f32 %v100, %v102
    %v104 = vadd.f32 %v100, %v103
    %vm105 = vweird.f32 %v98
    %vm106 = vweird.f32 %v100
    %vm107 = vmor %vm105, %vm106
    %v108 = vsel %vm107, %v100, %v104
    %v109 = vand.u32 2147483647, %v98
    %vm110 = vcmp.eq.f32.partialorder %v109, 8.507059e+37
    %v111 = vand.u32 %v98, 2147483648
    %v112 = vor.u32 1.1754944e-38, %v111
    %v113 = vsel %vm110, %v112, %v108
    %v114 = vrcp.pop %v99
    %v115 = vmul.f32 %v99, %v114
    %v116 = vsub.f32 1.0, %v115
    %v117 = vmul.f32 %v114, %v116
    %v118 = vadd.f32 %v114, %v117
    %vm119 = vweird.f32 %v99
    %vm120 = vweird.f32 %v114
    %vm121 = vmor %vm119, %vm120
    %v122 = vsel %vm121, %v114, %v118
    %v123 = vand.u32 2147483647, %v99
    %vm124 = vcmp.eq.f32.partialorder %v123, 8.507059e+37
    %v125 = vand.u32 %v99, 2147483648
    %v126 = vor.u32 1.1754944e-38, %v125
    %v127 = vsel %vm124, %v126, %v122
    %v128 = vsel %vm96, %v57, 1.0
    %v129 = vsel %vm97, %v59, 1.0
    %v130 = vmul.f32 %v128, %v113
    %v131 = vmul.f32 %v129, %v127
    %v132 = vmul.f32 %v130, %v130
    %v133 = vmul.f32 %v131, %v131
    %v134 = vmul.f32 %v88, %v132
    %v135 = vmul.f32 %v89, %v133
    %v136 = vmul.f32 %v134, %v84
    %v137 = vmul.f32 %v135, %v85
    %v138 = vadd.f32 %v136, %v137
    %139 = vadd.xlane.f32.xlu0 %v138
    %v140 = vpop.xlane.xlu0 %139
    %v141 = vrot.slane %v140, 4
    %v142 = vadd.f32 %v140, %v141
    %v143 = vrot.slane %v142, 2
    %v144 = vadd.f32 %v142, %v143
    %v145 = vrot.slane %v144, 1
    %v146 = vadd.f32 %v144, %v145
    %s147 = vtos %v146
    %s148 = scalar_lea.smem [#allocation7], 0
    %149 = sst [smem:[%s148]] %s147
    // Predicated region
    $region18: #{tpu_custom_call.1} parent=1 // pred_check
      _
    $region19: #{tpu_custom_call.1} parent=1 // pred_check_branch
      %151 = sbr.rel (0) target = $region21
    $region20: #{tpu_custom_call.1} parent=1 // pred_region
      %153 = vsyncadd [#allocation4], 0
      %s155 = sshll.u32 %s2, 4
      %s156 = int_to_ptr.hbm [resolvable:$true] %s155
      %158 = dma.smem_to_hbm [#allocation7], 16, %s156, [#allocation4]
    $region21: #{tpu_custom_call.1} parent=1 // pred_fallthru
      _
    // Predicated region
    $region22: #{tpu_custom_call.1} parent=1 // pred_check
      _
    $region23: #{tpu_custom_call.1} parent=1 // pred_check_branch
      %160 = sbr.rel (0) target = $region25
    $region24: #{tpu_custom_call.1} parent=1 // pred_region
      %162 = dma.done [#allocation4], 16
    $region25: #{tpu_custom_call.1} parent=1 // pred_fallthru
      _
    %163 = sfence
    %164 = vsyncpa [#allocation3], 1
    %165 = vsyncpa [#allocation6], 1
    %166 = vsyncpa [#allocation4], 1

</llo_original>
